<compile_context>
chip_gen: v7x
topology: tpu7x:2x2x1
jax: 0.10.0
libtpu: 0.0.40
codegen_flags: <defaults>
</compile_context>

<pallas_src>
import functools

import jax
import jax.numpy as jnp
import numpy as np
from jax.experimental import pallas as pl
from jax.experimental.pallas import tpu as pltpu


# ----------------------------------------------------------------------------
# helpers
# ----------------------------------------------------------------------------
def _full_spec(shape):
    """BlockSpec covering the whole (small) array, grid = ()."""
    return pl.BlockSpec(shape, lambda *_: tuple(0 for _ in shape))


# ----------------------------------------------------------------------------
# single fused kernel: (PQMF analysis + encoder) -> embeddings / diversity
#                      -> (decoder bilinear + projection + PQMF synthesis)
# ----------------------------------------------------------------------------
def _fused_kernel(x_ref, wae_ref, bae_ref, wsyn_ref, bsyn_ref,
                  out_ref, div_ref, *, B, L):
    # ---- encoder (PQMF analysis folded into wae): (B*L, M) -> (B*L, H)
    h = jnp.tanh(
        jnp.dot(x_ref[...], wae_ref[...], preferred_element_type=jnp.float32)
        + bae_ref[...])

    # ---- temporal mean pooling per batch element -> feature embeddings (B, H)
    #      (replaces the dense block-diagonal pooling matmul)
    emb = jnp.concatenate(
        [jnp.mean(h[b * L:(b + 1) * L, :], axis=0, keepdims=True)
         for b in range(B)],
        axis=0)                                               # (B, H)

    # ---- diversity loss: mean variance of embeddings across the batch
    mu = jnp.mean(emb, axis=0, keepdims=True)
    div_ref[...] = jnp.mean((emb - mu) ** 2).reshape(1, 1)

    # ---- decoder bilinear mix through the (never materialised) complex
    #      matrix cm[b] = emb[b] (x) emb[b]:
    #      sum_j cm[b,i,j] * emb[b,j] == emb[b,i] * ||emb[b]||^2
    hdec = jnp.tanh(emb * jnp.sum(emb * emb, axis=-1, keepdims=True))  # (B, H)

    # ---- decoder projection with PQMF synthesis folded in -> waveform (B, T)
    out_ref[...] = (jnp.dot(hdec, wsyn_ref[...],
                            preferred_element_type=jnp.float32)
                    + bsyn_ref[...])


def fused_forward(frames, w_ae, b_ae, w_syn, b_syn, *, B, L):
    T = w_syn.shape[1]
    kernel = functools.partial(_fused_kernel, B=B, L=L)
    return pl.pallas_call(
        kernel,
        out_shape=(
            jax.ShapeDtypeStruct((B, T), jnp.float32),   # waveform (lane-dense)
            jax.ShapeDtypeStruct((1, 1), jnp.float32),   # diversity loss
        ),
        in_specs=[_full_spec(frames.shape), _full_spec(w_ae.shape),
                  _full_spec(b_ae.shape), _full_spec(w_syn.shape),
                  _full_spec(b_syn.shape)],
        out_specs=(_full_spec((B, T)), _full_spec((1, 1))),
        compiler_params=pltpu.CompilerParams(vmem_limit_bytes=32 * 1024 * 1024),
    )(frames, w_ae, b_ae, w_syn, b_syn)


# ----------------------------------------------------------------------------
# model
# ----------------------------------------------------------------------------
class AudioAutoencoderPallas:
    """Synthetic Pallas version of AudioAutoencoder.

    num_frames (= T // num_bands) must be fixed at construction because the
    decoder projection is a static-shape parameter.
    # TODO(synk): the original AudioDecoder starts from initial_sequence_length
    # =250 and upsamples to desired_length; JAX static shapes force us to fix
    # the output length up-front instead.
    """

    def __init__(self, num_bands=16, sccn_hidden_dim=32, num_frames=16,
                 seed=511990):
        self.M = num_bands
        self.H = sccn_hidden_dim
        self.L = num_frames
        M, H, L = self.M, self.H, self.L

        key = jax.random.PRNGKey(seed)
        k1, k2, k3, k4 = jax.random.split(key, 4)

        # PQMF: orthogonal cosine-modulated (DCT-IV) analysis matrix (M, M).
        # TODO(synk): real PQMF(100, num_bands) uses a 100th-order prototype
        # filter; here a single-tap polyphase (block transform) stand-in is used.
        m = np.arange(M)[:, None] + 0.5
        k = np.arange(M)[None, :] + 0.5
        A = np.asarray(np.sqrt(2.0 / M) * np.cos(np.pi / M * m * k),
                       dtype=np.float32)                    # analysis (A^-1 = A^T)

        # encoder params (Linear M -> H, PyTorch-style uniform init)
        lim_e = 1.0 / np.sqrt(M)
        enc_w = jax.random.uniform(k1, (M, H), jnp.float32, -lim_e, lim_e)
        enc_b = jax.random.uniform(k2, (1, H), jnp.float32, -lim_e, lim_e)

        # decoder params (Linear H -> M*L)
        lim_d = 1.0 / np.sqrt(H)
        dec_w = jax.random.uniform(k3, (H, M * L), jnp.float32, -lim_d, lim_d)
        dec_b = jax.random.uniform(k4, (1, M * L), jnp.float32, -lim_d, lim_d)

        A_j = jnp.asarray(A)

        # ---- fold PQMF analysis into the encoder weight:
        #      tanh(frames @ A^T @ W_enc + b)  ->  W_ae = A^T @ W_enc
        self.w_ae = jnp.dot(A_j.T, enc_w)                    # (M, H)
        self.b_ae = enc_b                                    # (1, H)

        # ---- fold PQMF synthesis into the decoder projection:
        #      out[b, l*M + n] = sum_k hdec[b,k] * W_syn[k, l*M + n] + b_syn[n']
        #      with W_syn[k, l*M + n] = sum_m dec_w[k, m*L + l] * A[m, n]
        dec_w3 = dec_w.reshape(H, M, L)                      # [k, m, l]
        self.w_syn = jnp.einsum('kml,mn->kln', dec_w3, A_j).reshape(H, M * L)
        dec_b2 = dec_b.reshape(M, L)                         # [m, l]
        self.b_syn = jnp.einsum('ml,mn->ln', dec_b2, A_j).reshape(1, M * L)

    @functools.partial(jax.jit, static_argnums=0)
    def __call__(self, x):
        B, C, T = x.shape                      # (B, 1, T)
        M, L = self.M, self.L
        assert C == 1 and T == M * L

        # frames of M consecutive samples (pure reshape, no copy)
        frames = x.reshape(B * L, M)

        out_flat, div = fused_forward(frames, self.w_ae, self.b_ae,
                                      self.w_syn, self.b_syn, B=B, L=L)

        out = out_flat.reshape(B, 1, T)
        return out, div[0, 0]


# ----------------------------------------------------------------------------
# main
# ----------------------------------------------------------------------------
if __name__ == "__main__":
    B, T = 2, 256
    num_bands, hidden = 16, 32
    L = T // num_bands

    key = jax.random.PRNGKey(0)
    x = jax.random.normal(key, (B, 1, T), dtype=jnp.float32)

    model = AudioAutoencoderPallas(num_bands=num_bands, sccn_hidden_dim=hidden,
                                   num_frames=L, seed=511990)
    out, diversity_loss = model(x)
    jax.block_until_ready((out, diversity_loss))

    assert out.shape == x.shape, (out.shape, x.shape)
    assert out.dtype == jnp.float32
    assert diversity_loss.shape == ()
    assert bool(jnp.all(jnp.isfinite(out)))
    print("KERNEL_OK")
</pallas_src>

<mosaic_0001>
module attributes {stable_mosaic.version = 11 : i64} {
  func.func @_fused_kernel(%arg0: memref<32x16xf32, #tpu.memory_space<vmem>>, %arg1: memref<16x32xf32, #tpu.memory_space<vmem>>, %arg2: memref<1x32xf32, #tpu.memory_space<vmem>>, %arg3: memref<32x256xf32, #tpu.memory_space<vmem>>, %arg4: memref<1x256xf32, #tpu.memory_space<vmem>>, %arg5: memref<2x256xf32, #tpu.memory_space<vmem>>, %arg6: memref<1x1xf32, #tpu.memory_space<vmem>>) attributes {dimension_semantics = [], scalar_prefetch = 0 : i64, scratch_operands = 0 : i64, tpu.core_type = #tpu.core_type<tc>} {
    %c0 = arith.constant 0 : index
    %c0_0 = arith.constant 0 : index
    %0 = vector.load %arg0[%c0, %c0_0] : memref<32x16xf32, #tpu.memory_space<vmem>>, vector<32x16xf32>
    %c0_1 = arith.constant 0 : index
    %c0_2 = arith.constant 0 : index
    %1 = vector.load %arg1[%c0_1, %c0_2] : memref<16x32xf32, #tpu.memory_space<vmem>>, vector<16x32xf32>
    %cst = arith.constant dense<0.000000e+00> : vector<32x32xf32>
    %2 = tpu.matmul %0, %1, %cst {dimension_numbers = #tpu.dot_dimension_numbers<[1], [0], [0], [1], [0, 0, 1, 1], [], []>} : vector<32x16xf32>, vector<16x32xf32>, vector<32x32xf32> -> vector<32x32xf32>
    %c0_3 = arith.constant 0 : index
    %c0_4 = arith.constant 0 : index
    %3 = vector.load %arg2[%c0_3, %c0_4] : memref<1x32xf32, #tpu.memory_space<vmem>>, vector<1x32xf32>
    %4 = vector.broadcast %3 : vector<1x32xf32> to vector<32x32xf32>
    %5 = arith.addf %2, %4 : vector<32x32xf32>
    %6 = math.tanh %5 : vector<32x32xf32>
    %7 = vector.extract_strided_slice %6 {offsets = [0, 0], sizes = [16, 32], strides = [1, 1]} : vector<32x32xf32> to vector<16x32xf32>
    %cst_5 = arith.constant dense<0.000000e+00> : vector<32xf32>
    %8 = vector.multi_reduction <add>, %7, %cst_5 [0] : vector<16x32xf32> to vector<32xf32>
    %9 = vector.shape_cast %8 : vector<32xf32> to vector<1x32xf32>
    %cst_6 = arith.constant 1.600000e+01 : f32
    %10 = vector.broadcast %cst_6 : f32 to vector<1x32xf32>
    %11 = arith.divf %9, %10 : vector<1x32xf32>
    %12 = vector.extract_strided_slice %6 {offsets = [16, 0], sizes = [16, 32], strides = [1, 1]} : vector<32x32xf32> to vector<16x32xf32>
    %cst_7 = arith.constant dense<0.000000e+00> : vector<32xf32>
    %13 = vector.multi_reduction <add>, %12, %cst_7 [0] : vector<16x32xf32> to vector<32xf32>
    %14 = vector.shape_cast %13 : vector<32xf32> to vector<1x32xf32>
    %cst_8 = arith.constant 1.600000e+01 : f32
    %15 = vector.broadcast %cst_8 : f32 to vector<1x32xf32>
    %16 = arith.divf %14, %15 : vector<1x32xf32>
    %17 = tpu.concatenate %11, %16 in 0 : vector<1x32xf32>, vector<1x32xf32> -> vector<2x32xf32>
    %cst_9 = arith.constant dense<0.000000e+00> : vector<32xf32>
    %18 = vector.multi_reduction <add>, %17, %cst_9 [0] : vector<2x32xf32> to vector<32xf32>
    %19 = vector.shape_cast %18 : vector<32xf32> to vector<1x32xf32>
    %cst_10 = arith.constant 2.000000e+00 : f32
    %20 = vector.broadcast %cst_10 : f32 to vector<1x32xf32>
    %21 = arith.divf %19, %20 : vector<1x32xf32>
    %22 = vector.broadcast %21 : vector<1x32xf32> to vector<2x32xf32>
    %23 = arith.subf %17, %22 : vector<2x32xf32>
    %24 = arith.mulf %23, %23 : vector<2x32xf32>
    %25 = vector.shape_cast %24 : vector<2x32xf32> to vector<1x2x32xf32>
    %cst_11 = arith.constant dense<0.000000e+00> : vector<1xf32>
    %26 = vector.multi_reduction <add>, %25, %cst_11 [1, 2] : vector<1x2x32xf32> to vector<1xf32>
    %27 = vector.shape_cast %26 : vector<1xf32> to vector<1x1x1xf32>
    %28 = vector.extract %27[0, 0, 0] : f32 from vector<1x1x1xf32>
    %cst_12 = arith.constant 6.400000e+01 : f32
    %29 = arith.divf %28, %cst_12 : f32
    %30 = vector.broadcast %29 : f32 to vector<1x1xf32>
    %c0_13 = arith.constant 0 : index
    %c0_14 = arith.constant 0 : index
    %31 = vector.load %arg6[%c0_13, %c0_14] : memref<1x1xf32, #tpu.memory_space<vmem>>, vector<1x1xf32>
    tpu.vector_store %arg6[%c0_13, %c0_14], %30 {strides = array<i32>} : memref<1x1xf32, #tpu.memory_space<vmem>>, vector<1x1xf32>,
    %32 = arith.mulf %17, %17 : vector<2x32xf32>
    %cst_15 = arith.constant dense<0.000000e+00> : vector<2xf32>
    %33 = vector.multi_reduction <add>, %32, %cst_15 [1] : vector<2x32xf32> to vector<2xf32>
    %34 = vector.shape_cast %33 : vector<2xf32> to vector<2x1xf32>
    %35 = vector.broadcast %34 : vector<2x1xf32> to vector<2x32xf32>
    %36 = arith.mulf %17, %35 : vector<2x32xf32>
    %37 = math.tanh %36 : vector<2x32xf32>
    %c0_16 = arith.constant 0 : index
    %c0_17 = arith.constant 0 : index
    %38 = vector.load %arg3[%c0_16, %c0_17] : memref<32x256xf32, #tpu.memory_space<vmem>>, vector<32x256xf32>
    %cst_18 = arith.constant dense<0.000000e+00> : vector<2x256xf32>
    %39 = tpu.matmul %37, %38, %cst_18 {dimension_numbers = #tpu.dot_dimension_numbers<[1], [0], [0], [1], [0, 0, 1, 1], [], []>} : vector<2x32xf32>, vector<32x256xf32>, vector<2x256xf32> -> vector<2x256xf32>
    %c0_19 = arith.constant 0 : index
    %c0_20 = arith.constant 0 : index
    %40 = vector.load %arg4[%c0_19, %c0_20] : memref<1x256xf32, #tpu.memory_space<vmem>>, vector<1x256xf32>
    %41 = vector.broadcast %40 : vector<1x256xf32> to vector<2x256xf32>
    %42 = arith.addf %39, %41 : vector<2x256xf32>
    %c0_21 = arith.constant 0 : index
    %c0_22 = arith.constant 0 : index
    %43 = vector.load %arg5[%c0_21, %c0_22] : memref<2x256xf32, #tpu.memory_space<vmem>>, vector<2x256xf32>
    tpu.vector_store %arg5[%c0_21, %c0_22], %42 {strides = array<i32>} : memref<2x256xf32, #tpu.memory_space<vmem>>, vector<2x256xf32>,
    return
  }
}

</mosaic_0001>

<llo_original>
// kernel: a_call__.1
$region0: #{a_call__.1}
  #allocation0 [shape = 'u32[]', space=smem, size = 0x4, offset = 0x4, fixed_abs, tag = 'smem constant byte address 0x4 - core index']
  #allocation1 [shape = 'u32[144,128]{1,0:T(1,128)}', space=vmem, size = 0x12000, scoped, tag = 'internal scratch']
  %s0 = inlined_call_operand.vmem [shape: f32[32,16], index: 0, kind: input, shape index: {}]
  %s1 = inlined_call_operand.vmem [shape: f32[16,32], index: 1, kind: input, shape index: {}]
  %s2 = inlined_call_operand.vmem [shape: f32[1,32], index: 2, kind: input, shape index: {}]
  %s3 = inlined_call_operand.hbm [shape: f32[32,256], index: 3, kind: input, shape index: {}]
  %s4 = inlined_call_operand.vmem [shape: f32[1,256], index: 4, kind: input, shape index: {}]
  %s5 = inlined_call_operand.vmem [shape: f32[2,256], index: 5, kind: output, shape index: {0}]
  %s6 = inlined_call_operand.hbm [shape: f32[1,1], index: 6, kind: output, shape index: {1}]
  %7 = xla_tuple %s5, %s6
  %s8 = sld [smem:[#allocation0]]
  $region42: #{a_call__.1} parent=0
    _
  %s10 = ssub.s32 1, %s8
  %s11 = scalar_select 0, %s10, %s8
  $region1: #{a_call__.1} parent=0
    #allocation2 [shape = 'u8[32768]{0}', space=vmem, size = 0x8000, scoped, tag = 'input window, operand 3, single buffered']
    #allocation3 [shape = 's32[1]{0}', space=sflag, size = 0x4, scoped, tag = 'scoped memory for a_call__.1']
    #allocation4 [shape = 's32[1]{0}', space=sflag, size = 0x4, scoped, tag = 'scoped memory for a_call__.1']
    #allocation5 [shape = 'u8[512]{0}', space=vmem, size = 0x400, scoped, tag = 'output window, operand 1, single buffered']
    %12 = vsyncpa [#allocation3], 0
    %13 = vsyncpa [#allocation4], 0
    // Predicated region
    $region2: #{a_call__.1} parent=1 // pred_check
      _
    $region3: #{a_call__.1} parent=1 // pred_check_branch
      %15 = sbr.rel (0) target = $region5
    $region4: #{a_call__.1} parent=1 // pred_region
      _
    $region5: #{a_call__.1} parent=1 // pred_fallthru
      _
    // Predicated region
    $region6: #{a_call__.1} parent=1 // pred_check
      _
    $region7: #{a_call__.1} parent=1 // pred_check_branch
      %17 = sbr.rel (0) target = $region9
    $region8: #{a_call__.1} parent=1 // pred_region
      _
    $region9: #{a_call__.1} parent=1 // pred_fallthru
      _
    // Predicated region
    $region10: #{a_call__.1} parent=1 // pred_check
      _
    $region11: #{a_call__.1} parent=1 // pred_check_branch
      %19 = sbr.rel (0) target = $region13
    $region12: #{a_call__.1} parent=1 // pred_region
      _
    $region13: #{a_call__.1} parent=1 // pred_fallthru
      _
    // Predicated region
    $region14: #{a_call__.1} parent=1 // pred_check
      _
    $region15: #{a_call__.1} parent=1 // pred_check_branch
      %21 = sbr.rel (0) target = $region17
    $region16: #{a_call__.1} parent=1 // pred_region
      %s23 = ssub.s32 1024, 1024
      %24 = vsyncadd [#allocation3], %s23
      %s25 = sshll.u32 [#allocation2], 4
      %s26 = int_to_ptr.vmem [resolvable:$true] %s25
      %31 = dma.hbm_to_vmem [thread:$0]  %s3, 1024, %s26, [#allocation3], 256, 256, 16
    $region17: #{a_call__.1} parent=1 // pred_fallthru
      _
    // Predicated region
    $region18: #{a_call__.1} parent=1 // pred_check
      _
    $region19: #{a_call__.1} parent=1 // pred_check_branch
      %33 = sbr.rel (0) target = $region21
    $region20: #{a_call__.1} parent=1 // pred_region
      _
    $region21: #{a_call__.1} parent=1 // pred_fallthru
      _
    // Predicated region
    $region22: #{a_call__.1} parent=1 // pred_check
      _
    $region23: #{a_call__.1} parent=1 // pred_check_branch
      %35 = sbr.rel (0) target = $region25
    $region24: #{a_call__.1} parent=1 // pred_region
      %36 = dma.done [#allocation3], 1024
    $region25: #{a_call__.1} parent=1 // pred_fallthru
      _
    %v37 = vld [vmem:[%s0] sm:$0xff]
    %v38 = vld [vmem:[%s0 + $0x8] sm:$0xff]
    %v39 = vld [vmem:[%s0 + $0x10] sm:$0xff]
    %v40 = vld [vmem:[%s0 + $0x18] sm:$0xff]
    %v41 = vld [vmem:[%s1] sm:$0xff]
    %v42 = vld [vmem:[%s1 + $0x8] sm:$0xff]
    %v43 = vld [vmem:[%s2] sm:$0x1]
    %v45 = vlaneseq
    %v46 = vshrl.u32 %v45, 7
    %v47 = vsub.s32 0, %v46
    %v48 = vrot.slane %v43, %v47
    %vm50 = vcmask 130048
    %v52 = vsel %vm50, %v37, 0
    %v55 = vsel %vm50, %v38, 0
    %v58 = vsel %vm50, %v39, 0
    %v61 = vsel %vm50, %v40, 0
    %63 = vmatprep.subr.mxu0 0.0
    %64 = vmatpush1.msra.mxu0 %v41
    %65 = vmatprep.subr.mxu0 0.0
    %66 = vmatpush1.msra.mxu0 %v42
    %67 = vmatprep.subr.mxu0 0.0
    %68 = vmatpush1.msra.mxu0 0.0
    %69 = vmatprep.subr.mxu0 0.0
    %70 = vmatpush1.msra.mxu0 0.0
    %71 = vmatprep.subr.mxu0 0.0
    %72 = vmatpush1.msra.mxu0 0.0
    %73 = vmatprep.subr.mxu0 0.0
    %74 = vmatpush1.msra.mxu0 0.0
    %75 = vmatprep.subr.mxu0 0.0
    %76 = vmatpush1.msra.mxu0 0.0
    %77 = vmatprep.subr.mxu0 0.0
    %78 = vmatpush1.msra.mxu0 0.0
    %79 = vmatprep.subr.mxu0 0.0
    %80 = vmatpush1.msra.mxu0 0.0
    %81 = vmatprep.subr.mxu0 0.0
    %82 = vmatpush1.msra.mxu0 0.0
    %83 = vmatprep.subr.mxu0 0.0
    %84 = vmatpush1.msra.mxu0 0.0
    %85 = vmatprep.subr.mxu0 0.0
    %86 = vmatpush1.msra.mxu0 0.0
    %87 = vmatprep.subr.mxu0 0.0
    %88 = vmatpush1.msra.mxu0 0.0
    %89 = vmatprep.subr.mxu0 0.0
    %90 = vmatpush1.msra.mxu0 0.0
    %91 = vmatprep.subr.mxu0 0.0
    %92 = vmatpush1.msra.mxu0 0.0
    %93 = vmatprep.subr.mxu0 0.0
    %94 = vmatpush1.msra.mxu0 0.0
    %95 = vmatprep.subr.mxu0 0.0
    %96 = vmatpush1.msra.mxu0 0.0
    %97 = vmatprep.subr.mxu0 0.0
    %98 = vmatpush1.msra.mxu0 0.0
    %99 = vmatprep.subr.mxu0 0.0
    %100 = vmatpush1.msra.mxu0 0.0
    %101 = vmatprep.subr.mxu0 0.0
    %102 = vmatpush1.msra.mxu0 0.0
    %103 = vmatprep.subr.mxu0 0.0
    %104 = vmatpush1.msra.mxu0 0.0
    %105 = vmatprep.subr.mxu0 0.0
    %106 = vmatpush1.msra.mxu0 0.0
    %107 = vmatprep.subr.mxu0 0.0
    %108 = vmatpush1.msra.mxu0 0.0
    %109 = vmatprep.subr.mxu0 0.0
    %110 = vmatpush1.msra.mxu0 0.0
    %111 = vmatprep.subr.mxu0 0.0
    %112 = vmatpush1.msra.mxu0 0.0
    %113 = vmatprep.subr.mxu0 0.0
    %114 = vmatpush1.msra.mxu0 0.0
    %115 = vmatprep.subr.mxu0 0.0
    %116 = vmatpush1.msra.mxu0 0.0
    %117 = vmatprep.subr.mxu0 0.0
    %118 = vmatpush1.msra.mxu0 0.0
    %119 = vmatprep.subr.mxu0 0.0
    %120 = vmatpush1.msra.mxu0 0.0
    %121 = vmatprep.subr.mxu0 0.0
    %122 = vmatpush1.msra.mxu0 0.0
    %123 = vmatprep.subr.mxu0 0.0
    %124 = vmatpush1.msra.mxu0 0.0
    %125 = vmatprep.subr.mxu0 0.0
    %126 = vmatpush1.msra.mxu0 0.0
    %127 = vmatprep.mubr.f32.mxu0 0.0
    %128 = vmatmul.mubr.f32.gmra.mrb[0].mxu0 %v52
    %v129 = vpop.f32.mrb[0].mxu0
    %v130 = vadd.f32 %v48, %v129
    %v131 = vpop.f32.mrb[0].mxu0
    %132 = vmatprep.mubr.f32.mxu0 0.0
    %133 = vmatmul.mubr.f32.gmra.mrb[0].mxu0 %v55
    %v134 = vpop.f32.mrb[0].mxu0
    %v135 = vadd.f32 %v48, %v134
    %v136 = vpop.f32.mrb[0].mxu0
    %137 = vmatprep.mubr.f32.mxu0 0.0
    %138 = vmatmul.mubr.f32.gmra.mrb[0].mxu0 %v58
    %v139 = vpop.f32.mrb[0].mxu0
    %v140 = vadd.f32 %v48, %v139
    %v141 = vpop.f32.mrb[0].mxu0
    %142 = vmatprep.mubr.f32.mxu0 0.0
    %143 = vmatmul.mubr.f32.gmra.mrb[0].mxu0 %v61
    %v144 = vpop.f32.mrb[0].mxu0
    %v145 = vadd.f32 %v48, %v144
    %v146 = vpop.f32.mrb[0].mxu0
    %147 = vdwg.mxu0
    %v148 = vtanh.pop %v130
    %v149 = vtanh.pop %v135
    %v150 = vtanh.pop %v140
    %v151 = vtanh.pop %v145
    %vm152 = vcmask 261120
    %v153 = vsel %vm152, %v148, 0.0
    %v154 = vsel %vm152, %v149, 0.0
    %v155 = vadd.f32 %v153, %v154
    %v156 = vrot.slane %v155, 4
    %v157 = vadd.f32 %v155, %v156
    %v158 = vrot.slane %v157, 2
    %v159 = vadd.f32 %v157, %v158
    %v160 = vrot.slane %v159, 1
    %v161 = vadd.f32 %v159, %v160
    %v162 = vrcp.pop 16.0
    %v163 = vmul.f32 %v161, %v162
    %v164 = vsel %vm152, %v150, 0.0
    %v165 = vsel %vm152, %v151, 0.0
    %v166 = vadd.f32 %v164, %v165
    %v167 = vrot.slane %v166, 4
    %v168 = vadd.f32 %v166, %v167
    %v169 = vrot.slane %v168, 2
    %v170 = vadd.f32 %v168, %v169
    %v171 = vrot.slane %v170, 1
    %v172 = vadd.f32 %v170, %v171
    %v173 = vmul.f32 %v172, %v162
    %vm174 = vcmask 1040384
    %v175 = vsel %vm174, %v163, %v173
    %vm176 = vcmask 254976
    %v177 = vsel %vm176, %v175, 0.0
    %v178 = vrot.slane %v177, 4
    %v179 = vadd.f32 %v177, %v178
    %v180 = vrot.slane %v179, 2
    %v181 = vadd.f32 %v179, %v180
    %v182 = vrot.slane %v181, 1
    %v183 = vadd.f32 %v181, %v182
    %v184 = vrcp.pop 2.0
    %v185 = vmul.f32 %v183, %v184
    %v186 = vsub.f32 %v175, %v185
    %v187 = vmul.f32 %v186, %v186
    %v188 = vsel %vm176, %v187, 0.0
    %189 = vadd.xlane.f32.xlu0 %v188
    %v190 = vpop.xlane.xlu0 %189
    %v191 = vrot.slane %v190, 4
    %v192 = vadd.f32 %v190, %v191
    %v193 = vrot.slane %v192, 2
    %v194 = vadd.f32 %v192, %v193
    %v195 = vrot.slane %v194, 1
    %v196 = vadd.f32 %v194, %v195
    %s197 = vtos %v196
    %v198 = vrcp.pop 64.0
    %s199 = vtos %v198
    %s200 = smul.f32 %s197, %s199
    %v201 = vstv %s200
    %vm202 = vcmask 0
    %203 = vst.msk [vmem:[#allocation5] sm:$0x1] %vm202, %v201
    %v204 = vmul.f32 %v175, %v175
    %v205 = vsel %vm176, %v204, 0.0
    %206 = vadd.xlane.f32.xlu0 %v205
    %v207 = vpop.xlane.xlu0 %206
    %v208 = vmul.f32 %v175, %v207
    %v209 = vtanh.pop %v208
    %v210 = vld [vmem:[#allocation2] sm:$0xff]
    %v211 = vld [vmem:[#allocation2 + $0x8] sm:$0xff]
    %v212 = vld [vmem:[#allocation2 + $0x10] sm:$0xff]
    %v213 = vld [vmem:[#allocation2 + $0x18] sm:$0xff]
    %v214 = vld [vmem:[#allocation2 + $0x20] sm:$0xff]
    %v215 = vld [vmem:[#allocation2 + $0x28] sm:$0xff]
    %v216 = vld [vmem:[#allocation2 + $0x30] sm:$0xff]
    %v217 = vld [vmem:[#allocation2 + $0x38] sm:$0xff]
    %v218 = vld [vmem:[%s4] sm:$0x3]
    %v220 = vlaneseq
    %v221 = vshrl.u32 %v220, 7
    %v222 = vsub.s32 0, %v221
    %v223 = vrot.slane %v218, %v222
    %v224 = vlaneseq
    %v225 = vshrl.u32 %v224, 7
    %v226 = vsub.s32 1, %v225
    %v227 = vrot.slane %v218, %v226
    %v231 = vsel %vm152, %v209, 0
    %233 = vmatprep.subr.mxu0 %v211
    %234 = vmatpush1.msra.mxu0 %v210
    %235 = vmatprep.subr.mxu0 %v213
    %236 = vmatpush1.msra.mxu0 %v212
    %237 = vmatprep.subr.mxu0 %v215
    %238 = vmatpush1.msra.mxu0 %v214
    %239 = vmatprep.subr.mxu0 %v217
    %240 = vmatpush1.msra.mxu0 %v216
    %241 = vmatprep.subr.mxu0 0.0
    %242 = vmatpush1.msra.mxu0 0.0
    %243 = vmatprep.subr.mxu0 0.0
    %244 = vmatpush1.msra.mxu0 0.0
    %245 = vmatprep.subr.mxu0 0.0
    %246 = vmatpush1.msra.mxu0 0.0
    %247 = vmatprep.subr.mxu0 0.0
    %248 = vmatpush1.msra.mxu0 0.0
    %249 = vmatprep.subr.mxu0 0.0
    %250 = vmatpush1.msra.mxu0 0.0
    %251 = vmatprep.subr.mxu0 0.0
    %252 = vmatpush1.msra.mxu0 0.0
    %253 = vmatprep.subr.mxu0 0.0
    %254 = vmatpush1.msra.mxu0 0.0
    %255 = vmatprep.subr.mxu0 0.0
    %256 = vmatpush1.msra.mxu0 0.0
    %257 = vmatprep.subr.mxu0 0.0
    %258 = vmatpush1.msra.mxu0 0.0
    %259 = vmatprep.subr.mxu0 0.0
    %260 = vmatpush1.msra.mxu0 0.0
    %261 = vmatprep.subr.mxu0 0.0
    %262 = vmatpush1.msra.mxu0 0.0
    %263 = vmatprep.subr.mxu0 0.0
    %264 = vmatpush1.msra.mxu0 0.0
    %265 = vmatprep.subr.mxu0 0.0
    %266 = vmatpush1.msra.mxu0 0.0
    %267 = vmatprep.subr.mxu0 0.0
    %268 = vmatpush1.msra.mxu0 0.0
    %269 = vmatprep.subr.mxu0 0.0
    %270 = vmatpush1.msra.mxu0 0.0
    %271 = vmatprep.subr.mxu0 0.0
    %272 = vmatpush1.msra.mxu0 0.0
    %273 = vmatprep.subr.mxu0 0.0
    %274 = vmatpush1.msra.mxu0 0.0
    %275 = vmatprep.subr.mxu0 0.0
    %276 = vmatpush1.msra.mxu0 0.0
    %277 = vmatprep.subr.mxu0 0.0
    %278 = vmatpush1.msra.mxu0 0.0
    %279 = vmatprep.subr.mxu0 0.0
    %280 = vmatpush1.msra.mxu0 0.0
    %281 = vmatprep.subr.mxu0 0.0
    %282 = vmatpush1.msra.mxu0 0.0
    %283 = vmatprep.subr.mxu0 0.0
    %284 = vmatpush1.msra.mxu0 0.0
    %285 = vmatprep.subr.mxu0 0.0
    %286 = vmatpush1.msra.mxu0 0.0
    %287 = vmatprep.subr.mxu0 0.0
    %288 = vmatpush1.msra.mxu0 0.0
    %289 = vmatprep.subr.mxu0 0.0
    %290 = vmatpush1.msra.mxu0 0.0
    %291 = vmatprep.subr.mxu0 0.0
    %292 = vmatpush1.msra.mxu0 0.0
    %293 = vmatprep.subr.mxu0 0.0
    %294 = vmatpush1.msra.mxu0 0.0
    %295 = vmatprep.subr.mxu0 0.0
    %296 = vmatpush1.msra.mxu0 0.0
    %297 = vmatprep.mubr.f32.mxu0 0.0
    %298 = vmatmul.mubr.f32.gmra.mrb[0].mxu0 %v231
    %v299 = vpop.f32.mrb[0].mxu0
    %v300 = vadd.f32 %v223, %v299
    %v301 = vpop.f32.mrb[0].mxu0
    %v302 = vadd.f32 %v227, %v301
    %303 = vdwg.mxu0
    %v306 = vcombine.low %v300, %v302
    %v308 = vunpack.c.l.s4 1983009808
    %v309 = vunpack.c.0.s8 %v308
    %v310 = vlaneseq
    %v311 = vshrl.u32 %v310, 7
    %v312 = vsub.s32 %v309, %v311
    %v313 = vrot.slane %v306, %v312
    %315 = vst [vmem:[%s5] sm:$0xf] %v313
    // Predicated region
    $region26: #{a_call__.1} parent=1 // pred_check
      _
    $region27: #{a_call__.1} parent=1 // pred_check_branch
      %317 = sbr.rel (0) target = $region29
    $region28: #{a_call__.1} parent=1 // pred_region
      _
    $region29: #{a_call__.1} parent=1 // pred_fallthru
      _
    // Predicated region
    $region30: #{a_call__.1} parent=1 // pred_check
      _
    $region31: #{a_call__.1} parent=1 // pred_check_branch
      %319 = sbr.rel (0) target = $region33
    $region32: #{a_call__.1} parent=1 // pred_region
      %s321 = ssub.s32 16, 16
      %322 = vsyncadd [#allocation4], %s321
      %s324 = sshll.u32 [#allocation5], 4
      %s325 = int_to_ptr.vmem [resolvable:$true] %s324
      %327 = dma.vmem_to_hbm [thread:$0]  %s325, 16, %s6, [#allocation4]
    $region33: #{a_call__.1} parent=1 // pred_fallthru
      _
    // Predicated region
    $region34: #{a_call__.1} parent=1 // pred_check
      _
    $region35: #{a_call__.1} parent=1 // pred_check_branch
      %329 = sbr.rel (0) target = $region37
    $region36: #{a_call__.1} parent=1 // pred_region
      _
    $region37: #{a_call__.1} parent=1 // pred_fallthru
      _
    // Predicated region
    $region38: #{a_call__.1} parent=1 // pred_check
      _
    $region39: #{a_call__.1} parent=1 // pred_check_branch
      %331 = sbr.rel (0) target = $region41
    $region40: #{a_call__.1} parent=1 // pred_region
      %332 = dma.done [#allocation4], 16
    $region41: #{a_call__.1} parent=1 // pred_fallthru
      _
    %333 = vsyncpa [#allocation3], 1
    %334 = vsyncpa [#allocation4], 1

</llo_original>
